<compile_context>
chip_gen: v6e
topology: v6e:2x2x1
jax: 0.10.0
libtpu: 0.0.40
codegen_flags: <defaults>
</compile_context>

<pallas_src>
import jax
import jax.numpy as jnp
import numpy as np
from jax.experimental import pallas as pl
from jax.experimental.pallas import tpu as pltpu


# ---------------------------------------------------------------------------
# Pallas kernel: batched per-output-dim VIP marginalization.
#   m        = mean_s f_s(x)
#   phi      = (f - m) / sqrt(S - 1)
#   A        = q_aug @ phi          (q_aug row 0 = q_mu, rows 1..S = q_sqrt)
#   mean     = m + A[0]
#   var      = sum_{s>=1} A[s]^2    (noise added in the wrapper)
# ---------------------------------------------------------------------------
def vip_kernel(f_ref, qaug_ref, mean_ref, var_ref):
    f = f_ref[...]                                     # (Dt, S, Nt) float32
    s = f.shape[1]
    inv_sqrt = np.float32(1.0 / np.sqrt(s - 1.0))

    m = jnp.mean(f, axis=1, keepdims=True)             # (Dt, 1, Nt)
    phi = (f - m) * inv_sqrt                           # (Dt, S, Nt)

    # Single fused contraction over S (batched over the Dt output dims).
    # q_aug row 0 holds q_mu, rows 1..S hold q_sqrt; remaining rows are zero
    # padding (so they contribute nothing to the variance sum below).
    a = jnp.einsum('drs,dsn->drn', qaug_ref[...], phi,
                   preferred_element_type=jnp.float32)  # (Dt, R, Nt)

    mean_ref[...] = (m[:, 0, :] + a[:, 0, :]).astype(mean_ref.dtype)
    k = a[:, 1:, :]
    var_ref[...] = jnp.sum(k * k, axis=1).astype(var_ref.dtype)


def _round_up(x, m):
    return ((x + m - 1) // m) * m


def _pick_dt(d):
    """Output dims batched per grid step (avoid padding the D axis of f)."""
    for cand in (16, 8):
        if d % cand == 0:
            return cand
    return d


def vip_forward_pallas(f_dsn, q_mu, q_sqrt_tri, log_layer_noise=None):
    """
    f_dsn           : (D, S, N)  prior function samples, kernel-friendly layout
    q_mu            : (S, D)
    q_sqrt_tri      : (S*(S+1)//2, D)  lower-triangular entries (module storage)
    log_layer_noise : (D,) or None
    returns mean, var : (N, D) float32
    """
    D, S, N = f_dsn.shape
    if S < 2:
        raise ValueError("VIPLayer requires num_regression_coeffs >= 2 "
                         "(division by sqrt(S - 1)).")
    f32 = jnp.float32

    # Dense lower-triangular q_sqrt per output dim, fused with q_mu into an
    # augmented matrix q_aug[d] = [q_mu[:, d]^T ; q_sqrt[:, :, d]]; rows padded
    # with zeros up to a multiple of 8 sublanes.
    li, lj = np.tril_indices(S)
    q_sqrt = jnp.zeros((S, S, D), f32).at[li, lj].set(q_sqrt_tri.astype(f32))
    R = _round_up(S + 1, 8)
    q_aug = jnp.zeros((D, R, S), f32)
    q_aug = q_aug.at[:, 0, :].set(jnp.transpose(q_mu).astype(f32))
    q_aug = q_aug.at[:, 1:S + 1, :].set(jnp.transpose(q_sqrt, (2, 0, 1)))

    # Tiling: Dt output dims per step; N on lanes in multiples of 128, sized
    # so the double-buffered f tiles stay well inside scoped VMEM on every
    # generation (v7x has only 64 MiB physical / 32 MiB default scoped VMEM).
    Dt = _pick_dt(D)
    N128 = _round_up(N, 128)
    f_budget_bytes = 12 * 1024 * 1024
    nt_cap = max(128, (f_budget_bytes // (2 * Dt * S * 4)) // 128 * 128)
    Nt = min(N128, 2048, nt_cap)
    N_pad = _round_up(N, Nt)

    f_p = f_dsn.astype(f32)
    if N_pad != N:
        f_p = jnp.pad(f_p, ((0, 0), (0, 0), (0, N_pad - N)))

    grid = (D // Dt, N_pad // Nt)

    flops = int(2 * D * R * S * N_pad + 6 * D * S * N_pad)
    bytes_accessed = int(4 * (D * S * N_pad + D * R * S + 2 * D * N_pad))

    mean_p, var_p = pl.pallas_call(
        vip_kernel,
        out_shape=(
            jax.ShapeDtypeStruct((D, N_pad), f32),
            jax.ShapeDtypeStruct((D, N_pad), f32),
        ),
        grid=grid,
        in_specs=[
            pl.BlockSpec((Dt, S, Nt), lambda di, ni: (di, 0, ni)),
            pl.BlockSpec((Dt, R, S), lambda di, ni: (di, 0, 0)),
        ],
        out_specs=(
            pl.BlockSpec((Dt, Nt), lambda di, ni: (di, ni)),
            pl.BlockSpec((Dt, Nt), lambda di, ni: (di, ni)),
        ),
        compiler_params=pltpu.CompilerParams(
            dimension_semantics=("parallel", "parallel"),
            vmem_limit_bytes=32 * 1024 * 1024,
        ),
        cost_estimate=pl.CostEstimate(
            flops=flops, transcendentals=0, bytes_accessed=bytes_accessed),
    )(f_p, q_aug)

    mean = jnp.transpose(mean_p[:, :N])                 # (N, D)
    var = jnp.transpose(var_p[:, :N])                   # (N, D)
    if log_layer_noise is not None:
        var = var + jnp.exp(log_layer_noise.astype(f32))[None, :]
    # TODO(synk): optional mean_function support (module default is None).
    return mean, var


# ---------------------------------------------------------------------------
# Glue: deterministic parameter setup (mirrors VIPLayer.__init__) and a simple
# deterministic generative function (linear in X, one weight set per sample).
# ---------------------------------------------------------------------------
def make_vip_params(num_coeffs, output_dim,
                    q_mu_initial_value=0.1,
                    q_sqrt_initial_value=1.0,
                    log_layer_noise=-1.0):
    S, D = num_coeffs, output_dim
    q_mu = jnp.full((S, D), q_mu_initial_value, dtype=jnp.float32)
    q_sqrt = np.eye(S, dtype=np.float32) * q_sqrt_initial_value
    q_sqrt = np.tile(q_sqrt[:, :, None], [1, 1, D])     # (S, S, D)
    li, lj = np.tril_indices(S)
    q_sqrt_tri = jnp.asarray(q_sqrt[li, lj])            # (S*(S+1)/2, D)
    log_noise = jnp.full((D,), log_layer_noise, dtype=jnp.float32)
    return q_mu, q_sqrt_tri, log_noise


def expand_q_sqrt(q_sqrt_tri, num_coeffs, output_dim):
    li, lj = np.tril_indices(num_coeffs)
    q_sqrt = jnp.zeros((num_coeffs, num_coeffs, output_dim), dtype=jnp.float32)
    return q_sqrt.at[li, lj].set(q_sqrt_tri)


def generative_function_dsn(X, W, b):
    """f_s(x) = X @ W_s + b_s, produced directly in (D_out, S, N) layout."""
    return jnp.einsum('nd,sdo->osn', X, W) + jnp.transpose(b)[:, :, None]


# ---------------------------------------------------------------------------
# Pure-JAX reference of VIPLayer.forward (mirrors the PyTorch code, f in the
# module's native (S, N, D) layout).
# ---------------------------------------------------------------------------
def vip_forward_ref(f, q_mu, q_sqrt_full, log_layer_noise):
    S = f.shape[0]
    m = jnp.mean(f, axis=0, keepdims=True)
    phi = (f - m) / jnp.sqrt(jnp.float32(S - 1))
    mean = m[0] + jnp.einsum('snd,sd->nd', phi, q_mu)
    K = jnp.einsum('ind,sid->snd', phi, q_sqrt_full)
    K = jnp.sum(K * K, axis=0)
    if log_layer_noise is not None:
        K = K + jnp.exp(log_layer_noise)
    return mean, K


if __name__ == "__main__":
    # Small, deterministic problem sizes.
    N, D_in, D_out, S = 16, 8, 4, 8   # batch, input dim, output dim, num_coeffs

    key = jax.random.PRNGKey(0)
    kx, kw, kb = jax.random.split(key, 3)
    X = jax.random.normal(kx, (N, D_in), dtype=jnp.float32)
    W = jax.random.normal(kw, (S, D_in, D_out), dtype=jnp.float32) * 0.3
    b = jax.random.normal(kb, (S, D_out), dtype=jnp.float32) * 0.1

    # Parameters of the VIP layer (deterministic init, as in __init__).
    q_mu, q_sqrt_tri, log_noise = make_vip_params(S, D_out)

    # Prior samples generated directly in kernel-friendly (D, S, N) layout
    # (no HBM transpose of the largest tensor before the kernel).
    f_dsn = generative_function_dsn(X, W, b)             # (D, S, N)

    mean, var = vip_forward_pallas(f_dsn, q_mu, q_sqrt_tri, log_noise)
    mean = jax.block_until_ready(mean)
    var = jax.block_until_ready(var)

    # Reference in the module's native (S, N, D) layout.
    f_snd = jnp.transpose(f_dsn, (1, 2, 0))              # (S, N, D)
    q_sqrt_full = expand_q_sqrt(q_sqrt_tri, S, D_out)
    mean_ref, var_ref = vip_forward_ref(f_snd, q_mu, q_sqrt_full, log_noise)

    assert mean.shape == (N, D_out) and var.shape == (N, D_out)
    np.testing.assert_allclose(np.asarray(mean), np.asarray(mean_ref),
                               rtol=1e-5, atol=1e-5)
    np.testing.assert_allclose(np.asarray(var), np.asarray(var_ref),
                               rtol=1e-5, atol=1e-5)
    print("KERNEL_OK")
</pallas_src>

<mosaic_0001>
module attributes {stable_mosaic.version = 11 : i64} {
  func.func @vip_kernel(%arg0: i32, %arg1: i32, %arg2: memref<4x8x128xf32, #tpu.memory_space<vmem>>, %arg3: memref<4x16x8xf32, #tpu.memory_space<vmem>>, %arg4: memref<4x128xf32, #tpu.memory_space<vmem>>, %arg5: memref<4x128xf32, #tpu.memory_space<vmem>>) attributes {dimension_semantics = [#tpu.dimension_semantics<parallel>, #tpu.dimension_semantics<parallel>], iteration_bounds = array<i64: 1, 1>, scalar_prefetch = 0 : i64, scratch_operands = 0 : i64, tpu.core_type = #tpu.core_type<tc>, window_params = [{transform_indices = @transform_0, window_bounds = array<i64: 4, 8, 128>}, {transform_indices = @transform_1, window_bounds = array<i64: 4, 16, 8>}, {transform_indices = @transform_2, window_bounds = array<i64: 4, 128>}, {transform_indices = @transform_3, window_bounds = array<i64: 4, 128>}]} {
    %c0 = arith.constant 0 : index
    %c0_0 = arith.constant 0 : index
    %c0_1 = arith.constant 0 : index
    %0 = vector.load %arg2[%c0, %c0_0, %c0_1] : memref<4x8x128xf32, #tpu.memory_space<vmem>>, vector<4x8x128xf32>
    %cst = arith.constant dense<0.000000e+00> : vector<4x128xf32>
    %1 = vector.multi_reduction <add>, %0, %cst [1] : vector<4x8x128xf32> to vector<4x128xf32>
    %2 = vector.shape_cast %1 : vector<4x128xf32> to vector<4x1x128xf32>
    %cst_2 = arith.constant 8.000000e+00 : f32
    %3 = vector.broadcast %cst_2 : f32 to vector<4x1x128xf32>
    %4 = arith.divf %2, %3 : vector<4x1x128xf32>
    %5 = vector.broadcast %4 : vector<4x1x128xf32> to vector<4x8x128xf32>
    %6 = arith.subf %0, %5 : vector<4x8x128xf32>
    %cst_3 = arith.constant 0.377964467 : f32
    %7 = vector.broadcast %cst_3 : f32 to vector<4x8x128xf32>
    %8 = arith.mulf %6, %7 : vector<4x8x128xf32>
    %c0_4 = arith.constant 0 : index
    %c0_5 = arith.constant 0 : index
    %c0_6 = arith.constant 0 : index
    %9 = vector.load %arg3[%c0_4, %c0_5, %c0_6] : memref<4x16x8xf32, #tpu.memory_space<vmem>>, vector<4x16x8xf32>
    "tpu.trace_start"() <{level = 10 : i32, message = "drs,dsn->drn"}> : () -> ()
    %cst_7 = arith.constant dense<0.000000e+00> : vector<4x16x128xf32>
    %10 = tpu.matmul %9, %8, %cst_7 {dimension_numbers = #tpu.dot_dimension_numbers<[2], [1], [1], [2], [0, 0, 0, 1, 1, 2], [0], [0]>} : vector<4x16x8xf32>, vector<4x8x128xf32>, vector<4x16x128xf32> -> vector<4x16x128xf32>
    "tpu.trace_stop"() : () -> ()
    %11 = vector.shape_cast %4 : vector<4x1x128xf32> to vector<4x128xf32>
    %12 = vector.extract_strided_slice %10 {offsets = [0, 0, 0], sizes = [4, 1, 128], strides = [1, 1, 1]} : vector<4x16x128xf32> to vector<4x1x128xf32>
    %13 = vector.shape_cast %12 : vector<4x1x128xf32> to vector<4x128xf32>
    %14 = arith.addf %11, %13 : vector<4x128xf32>
    %c0_8 = arith.constant 0 : index
    %c0_9 = arith.constant 0 : index
    %15 = vector.load %arg4[%c0_8, %c0_9] : memref<4x128xf32, #tpu.memory_space<vmem>>, vector<4x128xf32>
    tpu.vector_store %arg4[%c0_8, %c0_9], %14 {strides = array<i32>} : memref<4x128xf32, #tpu.memory_space<vmem>>, vector<4x128xf32>,
    %16 = vector.extract_strided_slice %10 {offsets = [0, 1, 0], sizes = [4, 15, 128], strides = [1, 1, 1]} : vector<4x16x128xf32> to vector<4x15x128xf32>
    %17 = arith.mulf %16, %16 : vector<4x15x128xf32>
    %cst_10 = arith.constant dense<0.000000e+00> : vector<4x128xf32>
    %18 = vector.multi_reduction <add>, %17, %cst_10 [1] : vector<4x15x128xf32> to vector<4x128xf32>
    %c0_11 = arith.constant 0 : index
    %c0_12 = arith.constant 0 : index
    %19 = vector.load %arg5[%c0_11, %c0_12] : memref<4x128xf32, #tpu.memory_space<vmem>>, vector<4x128xf32>
    tpu.vector_store %arg5[%c0_11, %c0_12], %18 {strides = array<i32>} : memref<4x128xf32, #tpu.memory_space<vmem>>, vector<4x128xf32>,
    return
  }
  func.func @transform_0(%arg0: i32, %arg1: i32) -> (i32, i32, i32) {
    %c0_i32 = arith.constant 0 : i32
    %c0_i32_0 = arith.constant 0 : i32
    return %arg0, %c0_i32, %arg1 : i32, i32, i32
  }
  func.func @transform_1(%arg0: i32, %arg1: i32) -> (i32, i32, i32) {
    %c0_i32 = arith.constant 0 : i32
    %c0_i32_0 = arith.constant 0 : i32
    %c0_i32_1 = arith.constant 0 : i32
    return %arg0, %c0_i32, %c0_i32_0 : i32, i32, i32
  }
  func.func @transform_2(%arg0: i32, %arg1: i32) -> (i32, i32) {
    %c0_i32 = arith.constant 0 : i32
    return %arg0, %arg1 : i32, i32
  }
  func.func @transform_3(%arg0: i32, %arg1: i32) -> (i32, i32) {
    %c0_i32 = arith.constant 0 : i32
    return %arg0, %arg1 : i32, i32
  }
}

</mosaic_0001>

<llo_original>
// kernel: tpu_custom_call.1
$region0: #{tpu_custom_call.1}
  #allocation0 [shape = 'u32[]', space=smem, size = 0x4, offset = 0x4, fixed_abs, tag = 'smem constant byte address 0x4 - core index']
  #allocation1 [shape = 'u32[144,128]{1,0:T(1,128)}', space=vmem, size = 0x12000, scoped, tag = 'internal scratch']
  %s0 = inlined_call_operand.vmem [shape: f32[4,8,128], index: 0, kind: input, shape index: {}]
  %s1 = inlined_call_operand.vmem [shape: f32[4,16,8], index: 1, kind: input, shape index: {}]
  %s2 = inlined_call_operand.hbm [shape: f32[4,128], index: 2, kind: output, shape index: {0}]
  %s3 = inlined_call_operand.hbm [shape: f32[4,128], index: 3, kind: output, shape index: {1}]
  %4 = xla_tuple %s2, %s3
  %s5 = sld [smem:[#allocation0]]
  $region26: #{tpu_custom_call.1} parent=0
    _
  %s7 = ssub.s32 1, %s5
  %s8 = scalar_select 0, %s7, %s5
  $region1: #{tpu_custom_call.1} parent=0
    #allocation2 [shape = 'u8[2048]{0}', space=vmem, size = 0x800, scoped, tag = 'output window, operand 0, single buffered']
    #allocation3 [shape = 's32[1]{0}', space=sflag, size = 0x4, scoped, tag = 'scoped memory for tpu_custom_call.1']
    #allocation4 [shape = 'u8[2048]{0}', space=vmem, size = 0x800, scoped, tag = 'output window, operand 1, single buffered']
    #allocation5 [shape = 's32[1]{0}', space=sflag, size = 0x4, scoped, tag = 'scoped memory for tpu_custom_call.1']
    %9 = vsyncpa [#allocation3], 0
    %10 = vsyncpa [#allocation5], 0
    // Predicated region
    $region2: #{tpu_custom_call.1} parent=1 // pred_check
      _
    $region3: #{tpu_custom_call.1} parent=1 // pred_check_branch
      %12 = sbr.rel (0) target = $region5
    $region4: #{tpu_custom_call.1} parent=1 // pred_region
      _
    $region5: #{tpu_custom_call.1} parent=1 // pred_fallthru
      _
    // Predicated region
    $region6: #{tpu_custom_call.1} parent=1 // pred_check
      _
    $region7: #{tpu_custom_call.1} parent=1 // pred_check_branch
      %14 = sbr.rel (0) target = $region9
    $region8: #{tpu_custom_call.1} parent=1 // pred_region
      _
    $region9: #{tpu_custom_call.1} parent=1 // pred_fallthru
      _
    %v15 = vld [vmem:[%s0] sm:$0xff]
    %v16 = vld [vmem:[%s0 + $0x8] sm:$0xff]
    %v17 = vld [vmem:[%s0 + $0x10] sm:$0xff]
    %v18 = vld [vmem:[%s0 + $0x18] sm:$0xff]
    %v19 = vrot.slane %v15, 4
    %v20 = vadd.f32 %v15, %v19
    %v21 = vrot.slane %v20, 2
    %v22 = vadd.f32 %v20, %v21
    %v23 = vrot.slane %v22, 1
    %v24 = vadd.f32 %v22, %v23
    %v25 = vrot.slane %v16, 4
    %v26 = vadd.f32 %v16, %v25
    %v27 = vrot.slane %v26, 2
    %v28 = vadd.f32 %v26, %v27
    %v29 = vrot.slane %v28, 1
    %v30 = vadd.f32 %v28, %v29
    %v31 = vrot.slane %v17, 4
    %v32 = vadd.f32 %v17, %v31
    %v33 = vrot.slane %v32, 2
    %v34 = vadd.f32 %v32, %v33
    %v35 = vrot.slane %v34, 1
    %v36 = vadd.f32 %v34, %v35
    %v37 = vrot.slane %v18, 4
    %v38 = vadd.f32 %v18, %v37
    %v39 = vrot.slane %v38, 2
    %v40 = vadd.f32 %v38, %v39
    %v41 = vrot.slane %v40, 1
    %v42 = vadd.f32 %v40, %v41
    %v43 = vrcp.pop 8.0
    %v44 = vmul.f32 %v24, %v43
    %v45 = vmul.f32 %v30, %v43
    %v46 = vmul.f32 %v36, %v43
    %v47 = vmul.f32 %v42, %v43
    %v48 = vsub.f32 %v15, %v44
    %v49 = vsub.f32 %v16, %v45
    %v50 = vsub.f32 %v17, %v46
    %v51 = vsub.f32 %v18, %v47
    %v52 = vmul.f32 %v48, 0.37796447
    %v53 = vmul.f32 %v49, 0.37796447
    %v54 = vmul.f32 %v50, 0.37796447
    %v55 = vmul.f32 %v51, 0.37796447
    %v56 = vld [vmem:[%s1] sm:$0xff]
    %v57 = vld [vmem:[%s1 + $0x8] sm:$0xff]
    %v58 = vld [vmem:[%s1 + $0x10] sm:$0xff]
    %v59 = vld [vmem:[%s1 + $0x18] sm:$0xff]
    %v60 = vld [vmem:[%s1 + $0x20] sm:$0xff]
    %v61 = vld [vmem:[%s1 + $0x28] sm:$0xff]
    %v62 = vld [vmem:[%s1 + $0x30] sm:$0xff]
    %v63 = vld [vmem:[%s1 + $0x38] sm:$0xff]
    %vm64 = vcmask 64512
    %v66 = vsel %vm64, %v56, 0
    %v69 = vsel %vm64, %v57, 0
    %71 = vmatprep.subr.mxu0 0.0
    %72 = vmatpush1.msra.mxu0 0.0
    %73 = vmatprep.subr.mxu0 0.0
    %74 = vmatpush1.msra.mxu0 0.0
    %75 = vmatprep.subr.mxu0 0.0
    %76 = vmatpush1.msra.mxu0 0.0
    %77 = vmatprep.subr.mxu0 0.0
    %78 = vmatpush1.msra.mxu0 0.0
    %79 = vmatprep.subr.mxu0 0.0
    %80 = vmatpush1.msra.mxu0 0.0
    %81 = vmatprep.subr.mxu0 0.0
    %82 = vmatpush1.msra.mxu0 0.0
    %83 = vmatprep.subr.mxu0 0.0
    %84 = vmatpush1.msra.mxu0 0.0
    %85 = vmatprep.subr.mxu0 0.0
    %86 = vmatpush1.msra.mxu0 0.0
    %87 = vmatprep.subr.mxu0 0.0
    %88 = vmatpush1.msra.mxu0 0.0
    %89 = vmatprep.subr.mxu0 0.0
    %90 = vmatpush1.msra.mxu0 0.0
    %91 = vmatprep.subr.mxu0 0.0
    %92 = vmatpush1.msra.mxu0 0.0
    %93 = vmatprep.subr.mxu0 0.0
    %94 = vmatpush1.msra.mxu0 0.0
    %95 = vmatprep.subr.mxu0 0.0
    %96 = vmatpush1.msra.mxu0 0.0
    %97 = vmatprep.subr.mxu0 0.0
    %98 = vmatpush1.msra.mxu0 0.0
    %99 = vmatprep.subr.mxu0 0.0
    %100 = vmatpush1.msra.mxu0 0.0
    %101 = vmatprep.subr.mxu0 0.0
    %102 = vmatpush1.msra.mxu0 %v52
    %103 = vmatprep.subr.mxu0 0.0
    %104 = vmatpush2.msra.mxu0 0.0
    %105 = vmatprep.subr.mxu0 0.0
    %106 = vmatpush2.msra.mxu0 0.0
    %107 = vmatprep.subr.mxu0 0.0
    %108 = vmatpush2.msra.mxu0 0.0
    %109 = vmatprep.subr.mxu0 0.0
    %110 = vmatpush2.msra.mxu0 0.0
    %111 = vmatprep.subr.mxu0 0.0
    %112 = vmatpush2.msra.mxu0 0.0
    %113 = vmatprep.subr.mxu0 0.0
    %114 = vmatpush2.msra.mxu0 0.0
    %115 = vmatprep.subr.mxu0 0.0
    %116 = vmatpush2.msra.mxu0 0.0
    %117 = vmatprep.subr.mxu0 0.0
    %118 = vmatpush2.msra.mxu0 0.0
    %119 = vmatprep.subr.mxu0 0.0
    %120 = vmatpush2.msra.mxu0 0.0
    %121 = vmatprep.subr.mxu0 0.0
    %122 = vmatpush2.msra.mxu0 0.0
    %123 = vmatprep.subr.mxu0 0.0
    %124 = vmatpush2.msra.mxu0 0.0
    %125 = vmatprep.subr.mxu0 0.0
    %126 = vmatpush2.msra.mxu0 0.0
    %127 = vmatprep.subr.mxu0 0.0
    %128 = vmatpush2.msra.mxu0 0.0
    %129 = vmatprep.subr.mxu0 0.0
    %130 = vmatpush2.msra.mxu0 0.0
    %131 = vmatprep.subr.mxu0 0.0
    %132 = vmatpush2.msra.mxu0 0.0
    %133 = vmatprep.subr.mxu0 0.0
    %134 = vmatpush2.msra.mxu0 0.0
    %135 = vmatprep.mubr.f32.mxu0 0.0
    %136 = vmatmul.mubr.f32.gmra.mxu0 %v66
    %v137 = vpop.f32.mrf.mxu0
    %v138 = vadd.f32 0.0, %v137
    %v139 = vpop.f32.mrf.mxu0
    %140 = vmatprep.mubr.f32.mxu0 0.0
    %141 = vmatmul.mubr.f32.gmra.mxu0 %v69
    %v142 = vpop.f32.mrf.mxu0
    %v143 = vadd.f32 0.0, %v142
    %v144 = vpop.f32.mrf.mxu0
    %145 = vdwg.mxu0
    %v147 = vsel %vm64, %v58, 0
    %v150 = vsel %vm64, %v59, 0
    %152 = vmatprep.subr.mxu0 0.0
    %153 = vmatpush1.msra.mxu0 0.0
    %154 = vmatprep.subr.mxu0 0.0
    %155 = vmatpush1.msra.mxu0 0.0
    %156 = vmatprep.subr.mxu0 0.0
    %157 = vmatpush1.msra.mxu0 0.0
    %158 = vmatprep.subr.mxu0 0.0
    %159 = vmatpush1.msra.mxu0 0.0
    %160 = vmatprep.subr.mxu0 0.0
    %161 = vmatpush1.msra.mxu0 0.0
    %162 = vmatprep.subr.mxu0 0.0
    %163 = vmatpush1.msra.mxu0 0.0
    %164 = vmatprep.subr.mxu0 0.0
    %165 = vmatpush1.msra.mxu0 0.0
    %166 = vmatprep.subr.mxu0 0.0
    %167 = vmatpush1.msra.mxu0 0.0
    %168 = vmatprep.subr.mxu0 0.0
    %169 = vmatpush1.msra.mxu0 0.0
    %170 = vmatprep.subr.mxu0 0.0
    %171 = vmatpush1.msra.mxu0 0.0
    %172 = vmatprep.subr.mxu0 0.0
    %173 = vmatpush1.msra.mxu0 0.0
    %174 = vmatprep.subr.mxu0 0.0
    %175 = vmatpush1.msra.mxu0 0.0
    %176 = vmatprep.subr.mxu0 0.0
    %177 = vmatpush1.msra.mxu0 0.0
    %178 = vmatprep.subr.mxu0 0.0
    %179 = vmatpush1.msra.mxu0 0.0
    %180 = vmatprep.subr.mxu0 0.0
    %181 = vmatpush1.msra.mxu0 0.0
    %182 = vmatprep.subr.mxu0 0.0
    %183 = vmatpush1.msra.mxu0 %v53
    %184 = vmatprep.subr.mxu0 0.0
    %185 = vmatpush2.msra.mxu0 0.0
    %186 = vmatprep.subr.mxu0 0.0
    %187 = vmatpush2.msra.mxu0 0.0
    %188 = vmatprep.subr.mxu0 0.0
    %189 = vmatpush2.msra.mxu0 0.0
    %190 = vmatprep.subr.mxu0 0.0
    %191 = vmatpush2.msra.mxu0 0.0
    %192 = vmatprep.subr.mxu0 0.0
    %193 = vmatpush2.msra.mxu0 0.0
    %194 = vmatprep.subr.mxu0 0.0
    %195 = vmatpush2.msra.mxu0 0.0
    %196 = vmatprep.subr.mxu0 0.0
    %197 = vmatpush2.msra.mxu0 0.0
    %198 = vmatprep.subr.mxu0 0.0
    %199 = vmatpush2.msra.mxu0 0.0
    %200 = vmatprep.subr.mxu0 0.0
    %201 = vmatpush2.msra.mxu0 0.0
    %202 = vmatprep.subr.mxu0 0.0
    %203 = vmatpush2.msra.mxu0 0.0
    %204 = vmatprep.subr.mxu0 0.0
    %205 = vmatpush2.msra.mxu0 0.0
    %206 = vmatprep.subr.mxu0 0.0
    %207 = vmatpush2.msra.mxu0 0.0
    %208 = vmatprep.subr.mxu0 0.0
    %209 = vmatpush2.msra.mxu0 0.0
    %210 = vmatprep.subr.mxu0 0.0
    %211 = vmatpush2.msra.mxu0 0.0
    %212 = vmatprep.subr.mxu0 0.0
    %213 = vmatpush2.msra.mxu0 0.0
    %214 = vmatprep.subr.mxu0 0.0
    %215 = vmatpush2.msra.mxu0 0.0
    %216 = vmatprep.mubr.f32.mxu0 0.0
    %217 = vmatmul.mubr.f32.gmra.mxu0 %v147
    %v218 = vpop.f32.mrf.mxu0
    %v219 = vadd.f32 0.0, %v218
    %v220 = vpop.f32.mrf.mxu0
    %221 = vmatprep.mubr.f32.mxu0 0.0
    %222 = vmatmul.mubr.f32.gmra.mxu0 %v150
    %v223 = vpop.f32.mrf.mxu0
    %v224 = vadd.f32 0.0, %v223
    %v225 = vpop.f32.mrf.mxu0
    %226 = vdwg.mxu0
    %v228 = vsel %vm64, %v60, 0
    %v231 = vsel %vm64, %v61, 0
    %233 = vmatprep.subr.mxu0 0.0
    %234 = vmatpush1.msra.mxu0 0.0
    %235 = vmatprep.subr.mxu0 0.0
    %236 = vmatpush1.msra.mxu0 0.0
    %237 = vmatprep.subr.mxu0 0.0
    %238 = vmatpush1.msra.mxu0 0.0
    %239 = vmatprep.subr.mxu0 0.0
    %240 = vmatpush1.msra.mxu0 0.0
    %241 = vmatprep.subr.mxu0 0.0
    %242 = vmatpush1.msra.mxu0 0.0
    %243 = vmatprep.subr.mxu0 0.0
    %244 = vmatpush1.msra.mxu0 0.0
    %245 = vmatprep.subr.mxu0 0.0
    %246 = vmatpush1.msra.mxu0 0.0
    %247 = vmatprep.subr.mxu0 0.0
    %248 = vmatpush1.msra.mxu0 0.0
    %249 = vmatprep.subr.mxu0 0.0
    %250 = vmatpush1.msra.mxu0 0.0
    %251 = vmatprep.subr.mxu0 0.0
    %252 = vmatpush1.msra.mxu0 0.0
    %253 = vmatprep.subr.mxu0 0.0
    %254 = vmatpush1.msra.mxu0 0.0
    %255 = vmatprep.subr.mxu0 0.0
    %256 = vmatpush1.msra.mxu0 0.0
    %257 = vmatprep.subr.mxu0 0.0
    %258 = vmatpush1.msra.mxu0 0.0
    %259 = vmatprep.subr.mxu0 0.0
    %260 = vmatpush1.msra.mxu0 0.0
    %261 = vmatprep.subr.mxu0 0.0
    %262 = vmatpush1.msra.mxu0 0.0
    %263 = vmatprep.subr.mxu0 0.0
    %264 = vmatpush1.msra.mxu0 %v54
    %265 = vmatprep.subr.mxu0 0.0
    %266 = vmatpush2.msra.mxu0 0.0
    %267 = vmatprep.subr.mxu0 0.0
    %268 = vmatpush2.msra.mxu0 0.0
    %269 = vmatprep.subr.mxu0 0.0
    %270 = vmatpush2.msra.mxu0 0.0
    %271 = vmatprep.subr.mxu0 0.0
    %272 = vmatpush2.msra.mxu0 0.0
    %273 = vmatprep.subr.mxu0 0.0
    %274 = vmatpush2.msra.mxu0 0.0
    %275 = vmatprep.subr.mxu0 0.0
    %276 = vmatpush2.msra.mxu0 0.0
    %277 = vmatprep.subr.mxu0 0.0
    %278 = vmatpush2.msra.mxu0 0.0
    %279 = vmatprep.subr.mxu0 0.0
    %280 = vmatpush2.msra.mxu0 0.0
    %281 = vmatprep.subr.mxu0 0.0
    %282 = vmatpush2.msra.mxu0 0.0
    %283 = vmatprep.subr.mxu0 0.0
    %284 = vmatpush2.msra.mxu0 0.0
    %285 = vmatprep.subr.mxu0 0.0
    %286 = vmatpush2.msra.mxu0 0.0
    %287 = vmatprep.subr.mxu0 0.0
    %288 = vmatpush2.msra.mxu0 0.0
    %289 = vmatprep.subr.mxu0 0.0
    %290 = vmatpush2.msra.mxu0 0.0
    %291 = vmatprep.subr.mxu0 0.0
    %292 = vmatpush2.msra.mxu0 0.0
    %293 = vmatprep.subr.mxu0 0.0
    %294 = vmatpush2.msra.mxu0 0.0
    %295 = vmatprep.subr.mxu0 0.0
    %296 = vmatpush2.msra.mxu0 0.0
    %297 = vmatprep.mubr.f32.mxu0 0.0
    %298 = vmatmul.mubr.f32.gmra.mxu0 %v228
    %v299 = vpop.f32.mrf.mxu0
    %v300 = vadd.f32 0.0, %v299
    %v301 = vpop.f32.mrf.mxu0
    %302 = vmatprep.mubr.f32.mxu0 0.0
    %303 = vmatmul.mubr.f32.gmra.mxu0 %v231
    %v304 = vpop.f32.mrf.mxu0
    %v305 = vadd.f32 0.0, %v304
    %v306 = vpop.f32.mrf.mxu0
    %307 = vdwg.mxu0
    %v309 = vsel %vm64, %v62, 0
    %v312 = vsel %vm64, %v63, 0
    %314 = vmatprep.subr.mxu0 0.0
    %315 = vmatpush1.msra.mxu0 0.0
    %316 = vmatprep.subr.mxu0 0.0
    %317 = vmatpush1.msra.mxu0 0.0
    %318 = vmatprep.subr.mxu0 0.0
    %319 = vmatpush1.msra.mxu0 0.0
    %320 = vmatprep.subr.mxu0 0.0
    %321 = vmatpush1.msra.mxu0 0.0
    %322 = vmatprep.subr.mxu0 0.0
    %323 = vmatpush1.msra.mxu0 0.0
    %324 = vmatprep.subr.mxu0 0.0
    %325 = vmatpush1.msra.mxu0 0.0
    %326 = vmatprep.subr.mxu0 0.0
    %327 = vmatpush1.msra.mxu0 0.0
    %328 = vmatprep.subr.mxu0 0.0
    %329 = vmatpush1.msra.mxu0 0.0
    %330 = vmatprep.subr.mxu0 0.0
    %331 = vmatpush1.msra.mxu0 0.0
    %332 = vmatprep.subr.mxu0 0.0
    %333 = vmatpush1.msra.mxu0 0.0
    %334 = vmatprep.subr.mxu0 0.0
    %335 = vmatpush1.msra.mxu0 0.0
    %336 = vmatprep.subr.mxu0 0.0
    %337 = vmatpush1.msra.mxu0 0.0
    %338 = vmatprep.subr.mxu0 0.0
    %339 = vmatpush1.msra.mxu0 0.0
    %340 = vmatprep.subr.mxu0 0.0
    %341 = vmatpush1.msra.mxu0 0.0
    %342 = vmatprep.subr.mxu0 0.0
    %343 = vmatpush1.msra.mxu0 0.0
    %344 = vmatprep.subr.mxu0 0.0
    %345 = vmatpush1.msra.mxu0 %v55
    %346 = vmatprep.subr.mxu0 0.0
    %347 = vmatpush2.msra.mxu0 0.0
    %348 = vmatprep.subr.mxu0 0.0
    %349 = vmatpush2.msra.mxu0 0.0
    %350 = vmatprep.subr.mxu0 0.0
    %351 = vmatpush2.msra.mxu0 0.0
    %352 = vmatprep.subr.mxu0 0.0
    %353 = vmatpush2.msra.mxu0 0.0
    %354 = vmatprep.subr.mxu0 0.0
    %355 = vmatpush2.msra.mxu0 0.0
    %356 = vmatprep.subr.mxu0 0.0
    %357 = vmatpush2.msra.mxu0 0.0
    %358 = vmatprep.subr.mxu0 0.0
    %359 = vmatpush2.msra.mxu0 0.0
    %360 = vmatprep.subr.mxu0 0.0
    %361 = vmatpush2.msra.mxu0 0.0
    %362 = vmatprep.subr.mxu0 0.0
    %363 = vmatpush2.msra.mxu0 0.0
    %364 = vmatprep.subr.mxu0 0.0
    %365 = vmatpush2.msra.mxu0 0.0
    %366 = vmatprep.subr.mxu0 0.0
    %367 = vmatpush2.msra.mxu0 0.0
    %368 = vmatprep.subr.mxu0 0.0
    %369 = vmatpush2.msra.mxu0 0.0
    %370 = vmatprep.subr.mxu0 0.0
    %371 = vmatpush2.msra.mxu0 0.0
    %372 = vmatprep.subr.mxu0 0.0
    %373 = vmatpush2.msra.mxu0 0.0
    %374 = vmatprep.subr.mxu0 0.0
    %375 = vmatpush2.msra.mxu0 0.0
    %376 = vmatprep.subr.mxu0 0.0
    %377 = vmatpush2.msra.mxu0 0.0
    %378 = vmatprep.mubr.f32.mxu0 0.0
    %379 = vmatmul.mubr.f32.gmra.mxu0 %v309
    %v380 = vpop.f32.mrf.mxu0
    %v381 = vadd.f32 0.0, %v380
    %v382 = vpop.f32.mrf.mxu0
    %383 = vmatprep.mubr.f32.mxu0 0.0
    %384 = vmatmul.mubr.f32.gmra.mxu0 %v312
    %v385 = vpop.f32.mrf.mxu0
    %v386 = vadd.f32 0.0, %v385
    %v387 = vpop.f32.mrf.mxu0
    %388 = vdwg.mxu0
    %v389 = vadd.f32 %v44, %v138
    %v390 = vadd.f32 %v45, %v219
    %v391 = vadd.f32 %v46, %v300
    %v392 = vadd.f32 %v47, %v381
    %v397 = vrot.slane %v390, 7
    %vm398 = vcmask 1041409
    %v399 = vsel %vm398, %v397, %v389
    %v400 = vrot.slane %v391, 6
    %vm401 = vcmask 1042434
    %v402 = vsel %vm401, %v400, %v399
    %v403 = vrot.slane %v392, 5
    %vm404 = vcmask 1043459
    %v405 = vsel %vm404, %v403, %v402
    %407 = vst [vmem:[#allocation2] sm:$0xf] %v405
    %v408 = vmul.f32 %v138, %v138
    %v409 = vmul.f32 %v143, %v143
    %v410 = vmul.f32 %v219, %v219
    %v411 = vmul.f32 %v224, %v224
    %v412 = vmul.f32 %v300, %v300
    %v413 = vmul.f32 %v305, %v305
    %v414 = vmul.f32 %v381, %v381
    %v415 = vmul.f32 %v386, %v386
    %vm424 = vcmask 1046528
    %v425 = vrot.slane %v408, 1
    %v426 = vrot.slane %v409, 1
    %v427 = vsel %vm424, %v425, %v426
    %v428 = vrot.slane %v410, 1
    %v429 = vrot.slane %v411, 1
    %v430 = vsel %vm424, %v428, %v429
    %v431 = vrot.slane %v412, 1
    %v432 = vrot.slane %v413, 1
    %v433 = vsel %vm424, %v431, %v432
    %v434 = vrot.slane %v414, 1
    %v435 = vrot.slane %v415, 1
    %v436 = vsel %vm424, %v434, %v435
    %v445 = vsel %vm424, %v426, 0.0
    %v446 = vadd.f32 %v427, %v445
    %v447 = vrot.slane %v446, 4
    %v448 = vadd.f32 %v446, %v447
    %v449 = vrot.slane %v448, 2
    %v450 = vadd.f32 %v448, %v449
    %v451 = vrot.slane %v450, 1
    %v452 = vadd.f32 %v450, %v451
    %v453 = vsel %vm424, %v429, 0.0
    %v454 = vadd.f32 %v430, %v453
    %v455 = vrot.slane %v454, 4
    %v456 = vadd.f32 %v454, %v455
    %v457 = vrot.slane %v456, 2
    %v458 = vadd.f32 %v456, %v457
    %v459 = vrot.slane %v458, 1
    %v460 = vadd.f32 %v458, %v459
    %v461 = vsel %vm424, %v432, 0.0
    %v462 = vadd.f32 %v433, %v461
    %v463 = vrot.slane %v462, 4
    %v464 = vadd.f32 %v462, %v463
    %v465 = vrot.slane %v464, 2
    %v466 = vadd.f32 %v464, %v465
    %v467 = vrot.slane %v466, 1
    %v468 = vadd.f32 %v466, %v467
    %v469 = vsel %vm424, %v435, 0.0
    %v470 = vadd.f32 %v436, %v469
    %v471 = vrot.slane %v470, 4
    %v472 = vadd.f32 %v470, %v471
    %v473 = vrot.slane %v472, 2
    %v474 = vadd.f32 %v472, %v473
    %v475 = vrot.slane %v474, 1
    %v476 = vadd.f32 %v474, %v475
    %v481 = vsel %vm398, %v460, %v452
    %v482 = vsel %vm401, %v468, %v481
    %v483 = vsel %vm404, %v476, %v482
    %485 = vst [vmem:[#allocation4] sm:$0xf] %v483
    // Predicated region
    $region10: #{tpu_custom_call.1} parent=1 // pred_check
      _
    $region11: #{tpu_custom_call.1} parent=1 // pred_check_branch
      %487 = sbr.rel (0) target = $region13
    $region12: #{tpu_custom_call.1} parent=1 // pred_region
      %s489 = ssub.s32 64, 64
      %490 = vsyncadd [#allocation3], %s489
      %s492 = sshll.u32 [#allocation2], 4
      %s493 = int_to_ptr.vmem [resolvable:$true] %s492
      %495 = dma.vmem_to_hbm [thread:$0]  %s493, 64, %s2, [#allocation3]
    $region13: #{tpu_custom_call.1} parent=1 // pred_fallthru
      _
    // Predicated region
    $region14: #{tpu_custom_call.1} parent=1 // pred_check
      _
    $region15: #{tpu_custom_call.1} parent=1 // pred_check_branch
      %497 = sbr.rel (0) target = $region17
    $region16: #{tpu_custom_call.1} parent=1 // pred_region
      %s499 = ssub.s32 64, 64
      %500 = vsyncadd [#allocation5], %s499
      %s502 = sshll.u32 [#allocation4], 4
      %s503 = int_to_ptr.vmem [resolvable:$true] %s502
      %505 = dma.vmem_to_hbm [thread:$0]  %s503, 64, %s3, [#allocation5]
    $region17: #{tpu_custom_call.1} parent=1 // pred_fallthru
      _
    // Predicated region
    $region18: #{tpu_custom_call.1} parent=1 // pred_check
      _
    $region19: #{tpu_custom_call.1} parent=1 // pred_check_branch
      %507 = sbr.rel (0) target = $region21
    $region20: #{tpu_custom_call.1} parent=1 // pred_region
      %508 = dma.done [#allocation3], 64
    $region21: #{tpu_custom_call.1} parent=1 // pred_fallthru
      _
    // Predicated region
    $region22: #{tpu_custom_call.1} parent=1 // pred_check
      _
    $region23: #{tpu_custom_call.1} parent=1 // pred_check_branch
      %510 = sbr.rel (0) target = $region25
    $region24: #{tpu_custom_call.1} parent=1 // pred_region
      %511 = dma.done [#allocation5], 64
    $region25: #{tpu_custom_call.1} parent=1 // pred_fallthru
      _
    %512 = vsyncpa [#allocation3], 1
    %513 = vsyncpa [#allocation5], 1

</llo_original>
